<compile_context>
chip_gen: v6e
topology: v6e:2x2x1
jax: 0.10.0
libtpu: 0.0.40
codegen_flags: <defaults>
</compile_context>

<pallas_src>
import functools

import jax
import jax.numpy as jnp
from jax.experimental import pallas as pl
from jax.experimental.pallas import tpu as pltpu


def _caf_kernel(x_ref, o_ref, *, beta_threshold):
    x = x_ref[...]                                              # (tb, Fp) f32
    sim = jnp.where(x >= beta_threshold, x, jnp.zeros_like(x))  # threshold
    sumsq = jnp.sum(sim * sim, axis=1, keepdims=True)           # (tb, 1)
    # Guard on sumsq BEFORE rsqrt: rows that are all zero get inv = 0, and
    # sim * 0 == sim (both zero), reproducing the identity branch exactly.
    inv = jnp.where(sumsq > 0.0, jax.lax.rsqrt(sumsq), jnp.zeros_like(sumsq))
    o_ref[...] = (sim * inv).astype(o_ref.dtype)


def _round_up(n, m):
    return ((n + m - 1) // m) * m


def caf(x, beta_threshold, *, block_rows=None):
    """x: [B, F] float32. Returns [B, F] float32."""
    B, F = x.shape
    beta_threshold = float(beta_threshold)

    # Keep the feature axis whole and lane-dense (multiple of 128) so the
    # per-row reduction lives in one block and stores are unmasked.
    F_pad = _round_up(F, 128)
    bytes_per_row = F_pad * 4  # f32

    if block_rows is None:
        # Target ~1 MiB per input tile (measured sweet spot: >=256 KiB tiles
        # reach ~85% of HBM roofline).  VMEM footprint is roughly
        # 2 buffers x (in tile + out tile) = 4 x tile bytes, so a 1 MiB tile
        # keeps us ~4 MiB of scoped VMEM — well under the 16/32 MiB defaults
        # on every generation (v5e/v6e/v7x), so no vmem_limit override needed.
        target_tile_bytes = 1 << 20
        block_rows = max(8, target_tile_bytes // bytes_per_row)
        block_rows = max(8, (block_rows // 8) * 8)      # sublane-aligned
        block_rows = min(block_rows, 1024)              # diminishing returns
        # Don't make the tile bigger than the (padded) batch itself.
        block_rows = min(block_rows, _round_up(B, 8))

    B_pad = _round_up(B, block_rows)

    if (B_pad != B) or (F_pad != F):
        # Zero padding is neutral: padded feature lanes contribute 0 to the
        # row norm; padded rows are all-zero and sliced off below.
        x = jnp.pad(x, ((0, B_pad - B), (0, F_pad - F)))

    kernel = functools.partial(_caf_kernel, beta_threshold=beta_threshold)
    out = pl.pallas_call(
        kernel,
        out_shape=jax.ShapeDtypeStruct((B_pad, F_pad), x.dtype),
        grid_spec=pltpu.PrefetchScalarGridSpec(
            num_scalar_prefetch=0,
            grid=(B_pad // block_rows,),
            in_specs=[pl.BlockSpec((block_rows, F_pad), lambda i: (i, 0))],
            out_specs=pl.BlockSpec((block_rows, F_pad), lambda i: (i, 0)),
        ),
        compiler_params=pltpu.CompilerParams(
            dimension_semantics=("parallel",)),
    )(x)

    if (B_pad != B) or (F_pad != F):
        out = out[:B, :F]
    return out


def caf_ref(x, beta_threshold):
    sim = jnp.where(x >= beta_threshold, x, jnp.zeros_like(x))
    norm = jnp.linalg.norm(sim, ord=2, axis=1, keepdims=True)
    return jnp.where(norm != 0, sim / jnp.where(norm != 0, norm, 1.0), sim)


if __name__ == "__main__":
    beta_threshold = 0.25
    key = jax.random.PRNGKey(0)

    # Case 1: aligned shape (B multiple of 8, F multiple of 128).
    B, F = 8, 128
    x = jax.random.normal(key, (B, F), dtype=jnp.float32)
    # Force one row entirely below threshold so the norm==0 branch is hit.
    x = x.at[3].set(-jnp.abs(x[3]))
    out = jax.block_until_ready(caf(x, beta_threshold))
    ref = caf_ref(x, beta_threshold)
    assert out.shape == (B, F)
    assert jnp.allclose(out, ref, atol=1e-6, rtol=1e-5), "mismatch (aligned)"

    # Case 2: ragged shape exercising the B/F padding path.
    B2, F2 = 10, 200
    x2 = jax.random.normal(jax.random.PRNGKey(1), (B2, F2), dtype=jnp.float32)
    x2 = x2.at[5].set(-jnp.abs(x2[5]))
    out2 = jax.block_until_ready(caf(x2, beta_threshold))
    ref2 = caf_ref(x2, beta_threshold)
    assert out2.shape == (B2, F2)
    assert jnp.allclose(out2, ref2, atol=1e-6, rtol=1e-5), "mismatch (padded)"

    print("KERNEL_OK")
</pallas_src>

<mosaic_0001>
module attributes {stable_mosaic.version = 11 : i64} {
  func.func @_caf_kernel(%arg0: i32, %arg1: memref<8x128xf32, #tpu.memory_space<vmem>>, %arg2: memref<8x128xf32, #tpu.memory_space<vmem>>) attributes {dimension_semantics = [#tpu.dimension_semantics<parallel>], iteration_bounds = array<i64: 1>, scalar_prefetch = 0 : i64, scratch_operands = 0 : i64, tpu.core_type = #tpu.core_type<tc>, window_params = [{transform_indices = @transform_0, window_bounds = array<i64: 8, 128>}, {transform_indices = @transform_1, window_bounds = array<i64: 8, 128>}]} {
    %c0 = arith.constant 0 : index
    %c0_0 = arith.constant 0 : index
    %0 = vector.load %arg1[%c0, %c0_0] : memref<8x128xf32, #tpu.memory_space<vmem>>, vector<8x128xf32>
    %cst = arith.constant 2.500000e-01 : f32
    %1 = vector.broadcast %cst : f32 to vector<8x128xf32>
    %2 = arith.cmpf oge, %0, %1 : vector<8x128xf32>
    %cst_1 = arith.constant 0.000000e+00 : f32
    %3 = vector.broadcast %cst_1 : f32 to vector<8x128xf32>
    %4 = arith.select %2, %0, %3 : vector<8x128xi1>, vector<8x128xf32>
    %5 = arith.mulf %4, %4 : vector<8x128xf32>
    %cst_2 = arith.constant dense<0.000000e+00> : vector<8xf32>
    %6 = vector.multi_reduction <add>, %5, %cst_2 [1] : vector<8x128xf32> to vector<8xf32>
    %7 = vector.shape_cast %6 : vector<8xf32> to vector<8x1xf32>
    %cst_3 = arith.constant 0.000000e+00 : f32
    %8 = vector.broadcast %cst_3 : f32 to vector<8x1xf32>
    %9 = arith.cmpf ogt, %7, %8 : vector<8x1xf32>
    %10 = math.rsqrt %7 : vector<8x1xf32>
    %cst_4 = arith.constant 0.000000e+00 : f32
    %11 = vector.broadcast %cst_4 : f32 to vector<8x1xf32>
    %12 = arith.select %9, %10, %11 : vector<8x1xi1>, vector<8x1xf32>
    %13 = vector.broadcast %12 : vector<8x1xf32> to vector<8x128xf32>
    %14 = arith.mulf %4, %13 : vector<8x128xf32>
    %c0_5 = arith.constant 0 : index
    %c0_6 = arith.constant 0 : index
    %15 = vector.load %arg2[%c0_5, %c0_6] : memref<8x128xf32, #tpu.memory_space<vmem>>, vector<8x128xf32>
    tpu.vector_store %arg2[%c0_5, %c0_6], %14 {strides = array<i32>} : memref<8x128xf32, #tpu.memory_space<vmem>>, vector<8x128xf32>,
    return
  }
  func.func @transform_0(%arg0: i32) -> (i32, i32) {
    %c0_i32 = arith.constant 0 : i32
    %c0_i32_0 = arith.constant 0 : i32
    return %arg0, %c0_i32 : i32, i32
  }
  func.func @transform_1(%arg0: i32) -> (i32, i32) {
    %c0_i32 = arith.constant 0 : i32
    %c0_i32_0 = arith.constant 0 : i32
    return %arg0, %c0_i32 : i32, i32
  }
}

</mosaic_0001>

<llo_original>
// kernel: tpu_custom_call.1
$region0: #{tpu_custom_call.1}
  #allocation0 [shape = 'u32[]', space=smem, size = 0x4, offset = 0x4, fixed_abs, tag = 'smem constant byte address 0x4 - core index']
  #allocation1 [shape = 'u32[144,128]{1,0:T(1,128)}', space=vmem, size = 0x12000, scoped, tag = 'internal scratch']
  %s0 = inlined_call_operand.hbm [shape: f32[8,128], index: 0, kind: input, shape index: {}]
  %s1 = inlined_call_operand.hbm [shape: f32[8,128], index: 1, kind: output, shape index: {}]
  %s2 = sld [smem:[#allocation0]]
  $region18: #{tpu_custom_call.1} parent=0
    _
  %s4 = ssub.s32 1, %s2
  %s5 = scalar_select 0, %s4, %s2
  $region1: #{tpu_custom_call.1} parent=0
    #allocation2 [shape = 'u8[4096]{0}', space=vmem, size = 0x1000, scoped, tag = 'input window, operand 0, single buffered']
    #allocation3 [shape = 's32[1]{0}', space=sflag, size = 0x4, scoped, tag = 'scoped memory for tpu_custom_call.1']
    #allocation4 [shape = 's32[1]{0}', space=sflag, size = 0x4, scoped, tag = 'scoped memory for tpu_custom_call.1']
    #allocation5 [shape = 'u8[4096]{0}', space=vmem, size = 0x1000, scoped, tag = 'output window, operand 0, single buffered']
    %6 = vsyncpa [#allocation3], 0
    %7 = vsyncpa [#allocation4], 0
    // Predicated region
    $region2: #{tpu_custom_call.1} parent=1 // pred_check
      _
    $region3: #{tpu_custom_call.1} parent=1 // pred_check_branch
      %9 = sbr.rel (0) target = $region5
    $region4: #{tpu_custom_call.1} parent=1 // pred_region
      %s11 = ssub.s32 128, 128
      %12 = vsyncadd [#allocation3], %s11
      %s14 = sshll.u32 [#allocation2], 4
      %s15 = int_to_ptr.vmem [resolvable:$true] %s14
      %17 = dma.hbm_to_vmem [thread:$0]  %s0, 128, %s15, [#allocation3]
    $region5: #{tpu_custom_call.1} parent=1 // pred_fallthru
      _
    // Predicated region
    $region6: #{tpu_custom_call.1} parent=1 // pred_check
      _
    $region7: #{tpu_custom_call.1} parent=1 // pred_check_branch
      %19 = sbr.rel (0) target = $region9
    $region8: #{tpu_custom_call.1} parent=1 // pred_region
      %20 = dma.done [#allocation3], 128
    $region9: #{tpu_custom_call.1} parent=1 // pred_fallthru
      _
    %v21 = vld [vmem:[#allocation2] sm:$0xff]
    %vm22 = vcmp.ge.f32.partialorder %v21, 0.25
    %v23 = vsel %vm22, %v21, 0.0
    %v24 = vmul.f32 %v23, %v23
    %25 = vadd.xlane.f32.xlu0 %v24
    %v26 = vpop.xlane.xlu0 %25
    %vm27 = vcmp.gt.f32.partialorder %v26, 0.0
    %v28 = vrsqrt.pop %v26
    %v29 = vsel %vm27, %v28, 0.0
    %v30 = vmul.f32 %v23, %v29
    %31 = vst [vmem:[#allocation5] sm:$0xff] %v30
    // Predicated region
    $region10: #{tpu_custom_call.1} parent=1 // pred_check
      _
    $region11: #{tpu_custom_call.1} parent=1 // pred_check_branch
      %33 = sbr.rel (0) target = $region13
    $region12: #{tpu_custom_call.1} parent=1 // pred_region
      %s35 = ssub.s32 128, 128
      %36 = vsyncadd [#allocation4], %s35
      %s38 = sshll.u32 [#allocation5], 4
      %s39 = int_to_ptr.vmem [resolvable:$true] %s38
      %41 = dma.vmem_to_hbm [thread:$0]  %s39, 128, %s1, [#allocation4]
    $region13: #{tpu_custom_call.1} parent=1 // pred_fallthru
      _
    // Predicated region
    $region14: #{tpu_custom_call.1} parent=1 // pred_check
      _
    $region15: #{tpu_custom_call.1} parent=1 // pred_check_branch
      %43 = sbr.rel (0) target = $region17
    $region16: #{tpu_custom_call.1} parent=1 // pred_region
      %44 = dma.done [#allocation4], 128
    $region17: #{tpu_custom_call.1} parent=1 // pred_fallthru
      _
    %45 = vsyncpa [#allocation3], 1
    %46 = vsyncpa [#allocation4], 1

</llo_original>
